<compile_context>
chip_gen: v5e
topology: v5e:2x2
jax: 0.10.0
libtpu: 0.0.40
codegen_flags: <defaults>
</compile_context>

<pallas_src>
import functools

import jax
import jax.numpy as jnp
from jax import lax
from jax.experimental import pallas as pl
from jax.experimental.pallas import tpu as pltpu


def _rbf_kernel(d_ref, c_ref, o_ref, *, power, inv_width, num_rbf, pack):
    # d_ref: (TM, pack)            distances, `pack` per output row
    # c_ref: (1, pack*num_rbf)     RBF centers tiled `pack` times
    # o_ref: (TM, pack*num_rbf)    lane-dense output block (unmasked stores)
    tm = d_ref.shape[0]
    lanes = pack * num_rbf
    dp = d_ref[...] ** power                       # VPU; integer_pow handles p<0
    if pack == 1:
        dp_sel = dp                                # (TM,1) broadcasts below
    else:
        lane = lax.broadcasted_iota(jnp.int32, (tm, lanes), 1)
        dp_sel = dp[:, 0:1]
        for j in range(1, pack):
            dp_sel = jnp.where(lane >= j * num_rbf, dp[:, j:j + 1], dp_sel)
    diff = dp_sel - c_ref[...]                     # (TM, lanes)
    o_ref[...] = jnp.exp(-(diff * diff) * inv_width)   # EUP exp


@functools.partial(
    jax.jit,
    static_argnames=("power", "inv_width", "num_rbf", "pack", "out_shape"))
def _rbf_embed(d_flat, centers, *, power, inv_width, num_rbf, pack, out_shape):
    n = d_flat.shape[0]
    lanes = num_rbf * pack
    rows = pl.cdiv(n, pack)
    # Packed-row tile: large to amortize per-grid-step overhead, multiple of 8
    # sublanes, capped at the total number of rows.  4096 rows keeps total
    # double-buffered VMEM at ~8 MiB, inside every generation's default limit.
    tm = min(4096, max(8, ((rows + 7) // 8) * 8))
    rows_pad = ((rows + tm - 1) // tm) * tm
    n_pad = rows_pad * pack
    if n_pad != n:
        # Pad with 1.0 so negative powers stay finite in the padded region.
        d_flat = jnp.concatenate(
            [d_flat, jnp.ones((n_pad - n,), jnp.float32)])
    d2 = d_flat.reshape(rows_pad, pack)
    c_tiled = jnp.tile(centers.astype(jnp.float32), pack).reshape(1, lanes)

    kernel = functools.partial(_rbf_kernel, power=power, inv_width=inv_width,
                               num_rbf=num_rbf, pack=pack)
    out = pl.pallas_call(
        kernel,
        out_shape=jax.ShapeDtypeStruct((rows_pad, lanes), jnp.float32),
        grid=(rows_pad // tm,),
        in_specs=[
            pl.BlockSpec((tm, pack), lambda i: (i, 0)),
            pl.BlockSpec((1, lanes), lambda i: (0, 0)),
        ],
        out_specs=pl.BlockSpec((tm, lanes), lambda i: (i, 0)),
        compiler_params=pltpu.CompilerParams(
            dimension_semantics=("parallel",)),   # megacore sharding on v7x
    )(d2, c_tiled)

    # (rows_pad, pack*num_rbf) is the same row-major memory as (n_pad, num_rbf):
    # the reshape + slice fuse into the kernel's output copy under jit.
    out = out.reshape(n_pad, num_rbf)[:n]
    return out.reshape(*out_shape, num_rbf)


class EmbeddingPallas:
    """JAX/Pallas port of the PyTorch DTIGN `Embedding` RBF module."""

    def __init__(self, num_rbf=64, dmin=1.0, dmax=6.0, powers=(1, -2, -6)):
        self.num_rbf = num_rbf
        self.powers = tuple(powers)
        self.centers = {}
        self.widths = {}
        for p in self.powers:
            c = jnp.linspace(dmin ** p, dmax ** p, num_rbf, dtype=jnp.float32)
            self.centers[p] = c
            self.widths[p] = float((c[1] - c[0]) ** 2)
        # Pack `pack` distances per 128-lane output row for unmasked stores.
        if num_rbf <= 128 and 128 % num_rbf == 0:
            self.pack = 128 // num_rbf
        else:
            self.pack = 1

    def __call__(self, d, power):
        assert power in self.powers
        orig_shape = tuple(jnp.shape(d))
        d_flat = jnp.asarray(d, jnp.float32).reshape(-1)
        return _rbf_embed(
            d_flat, self.centers[power],
            power=int(power),
            inv_width=1.0 / self.widths[power],
            num_rbf=self.num_rbf,
            pack=self.pack,
            out_shape=orig_shape)


def _reference(d, centers, width, power):
    dp = jnp.asarray(d, jnp.float32) ** power
    return jnp.exp(-((dp[..., None] - centers) ** 2) / width)


if __name__ == "__main__":
    key = jax.random.PRNGKey(0)
    k0, k1 = jax.random.split(key)
    # Pairwise-distance-like inputs (small shapes).
    d_even = jax.random.uniform(k0, (2, 64), minval=1.0, maxval=6.0,
                                dtype=jnp.float32)
    d_odd = jax.random.uniform(k1, (2, 33), minval=1.0, maxval=6.0,
                               dtype=jnp.float32)   # exercises padding path

    emb = EmbeddingPallas(num_rbf=64, dmin=1.0, dmax=6.0, powers=[1, -2, -6])

    ok = True
    for d in (d_even, d_odd):
        for p in emb.powers:
            out = emb(d, p)
            jax.block_until_ready(out)
            ref = _reference(d, emb.centers[p], emb.widths[p], p)
            if out.shape != d.shape + (emb.num_rbf,):
                ok = False
            if not jnp.allclose(out, ref, atol=1e-5, rtol=1e-5):
                ok = False

    if ok:
        print("KERNEL_OK")
</pallas_src>

<mosaic_0001>
module attributes {stable_mosaic.version = 11 : i64} {
  func.func @_rbf_kernel(%arg0: i32, %arg1: memref<64x2xf32, #tpu.memory_space<vmem>>, %arg2: memref<1x128xf32, #tpu.memory_space<vmem>>, %arg3: memref<64x128xf32, #tpu.memory_space<vmem>>) attributes {dimension_semantics = [#tpu.dimension_semantics<parallel>], iteration_bounds = array<i64: 1>, scalar_prefetch = 0 : i64, scratch_operands = 0 : i64, tpu.core_type = #tpu.core_type<tc>, window_params = [{transform_indices = @transform_0, window_bounds = array<i64: 64, 2>}, {pipeline_mode = #tpu.pipeline_mode<synchronous>, transform_indices = @transform_1, window_bounds = array<i64: 1, 128>}, {transform_indices = @transform_2, window_bounds = array<i64: 64, 128>}]} {
    %c0 = arith.constant 0 : index
    %c0_0 = arith.constant 0 : index
    %0 = vector.load %arg1[%c0, %c0_0] : memref<64x2xf32, #tpu.memory_space<vmem>>, vector<64x2xf32>
    %1 = tpu.iota {dimensions = array<i32: 1>} : vector<64x128xi32>
    %2 = vector.extract_strided_slice %0 {offsets = [0, 0], sizes = [64, 1], strides = [1, 1]} : vector<64x2xf32> to vector<64x1xf32>
    %c64_i32 = arith.constant 64 : i32
    %3 = vector.broadcast %c64_i32 : i32 to vector<64x128xi32>
    %4 = arith.cmpi sge, %1, %3 : vector<64x128xi32>
    %5 = vector.extract_strided_slice %0 {offsets = [0, 1], sizes = [64, 1], strides = [1, 1]} : vector<64x2xf32> to vector<64x1xf32>
    %6 = vector.shape_cast %5 : vector<64x1xf32> to vector<64x1xf32>
    %7 = vector.broadcast %6 : vector<64x1xf32> to vector<64x128xf32>
    %8 = vector.shape_cast %2 : vector<64x1xf32> to vector<64x1xf32>
    %9 = vector.broadcast %8 : vector<64x1xf32> to vector<64x128xf32>
    %10 = arith.select %4, %7, %9 : vector<64x128xi1>, vector<64x128xf32>
    %c0_1 = arith.constant 0 : index
    %c0_2 = arith.constant 0 : index
    %11 = vector.load %arg2[%c0_1, %c0_2] : memref<1x128xf32, #tpu.memory_space<vmem>>, vector<1x128xf32>
    %12 = vector.broadcast %11 : vector<1x128xf32> to vector<64x128xf32>
    %13 = arith.subf %10, %12 : vector<64x128xf32>
    %14 = arith.mulf %13, %13 : vector<64x128xf32>
    %cst = arith.constant 0.000000e+00 : f32
    %15 = vector.broadcast %cst : f32 to vector<64x128xf32>
    %16 = arith.subf %15, %14 : vector<64x128xf32>
    %cst_3 = arith.constant 158.759781 : f32
    %17 = vector.broadcast %cst_3 : f32 to vector<64x128xf32>
    %18 = arith.mulf %16, %17 : vector<64x128xf32>
    %19 = math.exp %18 : vector<64x128xf32>
    %c0_4 = arith.constant 0 : index
    %c0_5 = arith.constant 0 : index
    %20 = vector.load %arg3[%c0_4, %c0_5] : memref<64x128xf32, #tpu.memory_space<vmem>>, vector<64x128xf32>
    tpu.vector_store %arg3[%c0_4, %c0_5], %19 {strides = array<i32>} : memref<64x128xf32, #tpu.memory_space<vmem>>, vector<64x128xf32>,
    return
  }
  func.func @transform_0(%arg0: i32) -> (i32, i32) {
    %c0_i32 = arith.constant 0 : i32
    %c0_i32_0 = arith.constant 0 : i32
    return %arg0, %c0_i32 : i32, i32
  }
  func.func @transform_1(%arg0: i32) -> (i32, i32) {
    %c0_i32 = arith.constant 0 : i32
    %c0_i32_0 = arith.constant 0 : i32
    %c0_i32_1 = arith.constant 0 : i32
    return %c0_i32, %c0_i32_0 : i32, i32
  }
  func.func @transform_2(%arg0: i32) -> (i32, i32) {
    %c0_i32 = arith.constant 0 : i32
    %c0_i32_0 = arith.constant 0 : i32
    return %arg0, %c0_i32 : i32, i32
  }
}

</mosaic_0001>

<llo_original>
// kernel: tile.9
$region0: #{tile.9}
  %s0 = inlined_call_operand.vmem [shape: f32[2,64], index: 0, kind: input, shape index: {}]
  %s1 = inlined_call_operand.vmem [shape: f32[1,128], index: 1, kind: output, shape index: {}]
  $region1: #{tile.9} parent=0
    #allocation0 [shape = 'u8[4096]{0}', space=vmem, size = 0x1000, scoped, tag = 'scoped mem for output reshape']
    #allocation1 [shape = 'u8[4096]{0}', space=vmem, size = 0x1000, scoped, tag = 'scoped mem for input reshape']
    %s3 = ssub.s32 4, 1
    %v4 = vld [vmem:[%s0] sm:%s3]
    %5 = vst [vmem:[#allocation1] sm:%s3] %v4
    %v6 = vld [vmem:[#allocation1] sm:$0x1]
    %vm7 = vcmask 523264
    %8 = vst.msk [vmem:[#allocation0] sm:$0x1] %vm7, %v6
    %s9 = scalar_lea.vmem [#allocation1], 1
    %v10 = vld [vmem:[%s9] sm:$0x1]
    %11 = vrot.lane.b32.xlu0 %v10, 64
    %v12 = vpop.permute.xlu0 %11
    %vm13 = vcmask 1048064
    %14 = vst.msk [vmem:[#allocation0] sm:$0x1] %vm13, %v12
    %s16 = ssub.s32 2, 1
    %v17 = vld [vmem:[#allocation0] sm:%s16]
    %s19 = ssub.s32 2, 1
    %20 = vst [vmem:[%s1] sm:%s19] %v17

// kernel: tile.8
$region0: #{tile.8}
  #allocation2 [shape = 's32[1]{0}', space=sflag, size = 0x4, scoped, tag = 'scoped memory for tile.8']
  %s0 = inlined_call_operand.hbm [shape: f32[64], index: 0, kind: input, shape index: {}]
  %s1 = inlined_call_operand.vmem [shape: f32[2,64], index: 1, kind: output, shape index: {}]
  $region1: #{tile.8} parent=0
    #allocation0 [shape = 'u8[512]{0}', space=vmem, size = 0x400, scoped, tag = 'operand span for operand 0']
    #allocation1 [shape = 's32[1]{0}', space=sflag, size = 0x4, scoped, tag = 'scoped memory for tile.8']
    %2 = vsyncpa [#allocation1], 0
    // Predicated region
    $region2: #{tile.8} parent=1 // pred_check
      _
    $region3: #{tile.8} parent=1 // pred_check_branch
      %4 = sbr.rel (0) target = $region5
    $region4: #{tile.8} parent=1 // pred_region
      %6 = vsyncadd [#allocation1], 0
      %s8 = sshll.u32 %s0, 4
      %s9 = int_to_ptr.hbm [resolvable:$true] %s8
      %s10 = sshll.u32 [#allocation0], 4
      %s11 = int_to_ptr.vmem [resolvable:$true] %s10
      %13 = dma.hbm_to_vmem [thread:$0]  %s9, 16, %s11, [#allocation1]
    $region5: #{tile.8} parent=1 // pred_fallthru
      _
    // Predicated region
    $region6: #{tile.8} parent=1 // pred_check
      _
    $region7: #{tile.8} parent=1 // pred_check_branch
      %15 = sbr.rel (0) target = $region9
    $region8: #{tile.8} parent=1 // pred_region
      %17 = dma.done [#allocation1], 16
    $region9: #{tile.8} parent=1 // pred_fallthru
      _
    %v18 = vld [vmem:[#allocation0] ss:$0 sm:$0xff]
    %19 = vst [vmem:[%s1] sm:$0x3] %v18
    %20 = vsyncpa [#allocation1], 1

// kernel: _rbf_embed.1
$region0: #{_rbf_embed.1}
  #allocation0 [shape = 'u32[]', space=smem, size = 0x4, offset = 0x4, fixed_abs, tag = 'smem constant byte address 0x4 - core index']
  #allocation1 [shape = 'u32[72,128]{1,0:T(1,128)}', space=vmem, size = 0x9000, scoped, tag = 'internal scratch']
  %s0 = inlined_call_operand.vmem [shape: f32[64,2], index: 0, kind: input, shape index: {}]
  %s1 = inlined_call_operand.vmem [shape: f32[1,128], index: 1, kind: input, shape index: {}]
  %s2 = inlined_call_operand.vmem [shape: f32[64,128], index: 2, kind: output, shape index: {}]
  %s3 = sld [smem:[#allocation0]]
  $region18: #{_rbf_embed.1} parent=0
    _
  %s5 = ssub.s32 1, %s3
  %s6 = scalar_select 0, %s5, %s3
  // Predicated region
  $region2: #{_rbf_embed.1} parent=0 // pred_check
    _
  $region3: #{_rbf_embed.1} parent=0 // pred_check_branch
    %8 = sbr.rel (0) target = $region5
  $region4: #{_rbf_embed.1} parent=0 // pred_region
    _
  $region5: #{_rbf_embed.1} parent=0 // pred_fallthru
    _
  // Predicated region
  $region6: #{_rbf_embed.1} parent=0 // pred_check
    _
  $region7: #{_rbf_embed.1} parent=0 // pred_check_branch
    %10 = sbr.rel (0) target = $region9
  $region8: #{_rbf_embed.1} parent=0 // pred_region
    _
  $region9: #{_rbf_embed.1} parent=0 // pred_fallthru
    _
  %v11 = vld [vmem:[%s0] sm:$0xff]
  %v12 = vld [vmem:[%s0 + $0x8] sm:$0xff]
  %v13 = vld [vmem:[%s0 + $0x10] sm:$0xff]
  %v14 = vld [vmem:[%s0 + $0x18] sm:$0xff]
  %v15 = vld [vmem:[%s0 + $0x20] sm:$0xff]
  %v16 = vld [vmem:[%s0 + $0x28] sm:$0xff]
  %v17 = vld [vmem:[%s0 + $0x30] sm:$0xff]
  %v18 = vld [vmem:[%s0 + $0x38] sm:$0xff]
  %v19 = vlaneseq
  %v20 = vand.u32 %v19, 127
  %vm21 = vcmp.ge.s32.totalorder %v20, 64
  %23 = vset.pattern.permute.xlu0 1
  %24 = vperm.xlu0 %23, %v11
  %v25 = vpop.permute.xlu0 %24
  %28 = vset.pattern.permute.xlu0 1
  %29 = vperm.xlu0 %28, %v12
  %v30 = vpop.permute.xlu0 %29
  %33 = vset.pattern.permute.xlu0 1
  %34 = vperm.xlu0 %33, %v13
  %v35 = vpop.permute.xlu0 %34
  %38 = vset.pattern.permute.xlu0 1
  %39 = vperm.xlu0 %38, %v14
  %v40 = vpop.permute.xlu0 %39
  %43 = vset.pattern.permute.xlu0 1
  %44 = vperm.xlu0 %43, %v15
  %v45 = vpop.permute.xlu0 %44
  %48 = vset.pattern.permute.xlu0 1
  %49 = vperm.xlu0 %48, %v16
  %v50 = vpop.permute.xlu0 %49
  %53 = vset.pattern.permute.xlu0 1
  %54 = vperm.xlu0 %53, %v17
  %v55 = vpop.permute.xlu0 %54
  %58 = vset.pattern.permute.xlu0 1
  %59 = vperm.xlu0 %58, %v18
  %v60 = vpop.permute.xlu0 %59
  %62 = vset.pattern.permute.xlu0 0
  %63 = vperm.xlu0 %62, %v11
  %v64 = vpop.permute.xlu0 %63
  %66 = vset.pattern.permute.xlu0 0
  %67 = vperm.xlu0 %66, %v12
  %v68 = vpop.permute.xlu0 %67
  %70 = vset.pattern.permute.xlu0 0
  %71 = vperm.xlu0 %70, %v13
  %v72 = vpop.permute.xlu0 %71
  %74 = vset.pattern.permute.xlu0 0
  %75 = vperm.xlu0 %74, %v14
  %v76 = vpop.permute.xlu0 %75
  %78 = vset.pattern.permute.xlu0 0
  %79 = vperm.xlu0 %78, %v15
  %v80 = vpop.permute.xlu0 %79
  %82 = vset.pattern.permute.xlu0 0
  %83 = vperm.xlu0 %82, %v16
  %v84 = vpop.permute.xlu0 %83
  %86 = vset.pattern.permute.xlu0 0
  %87 = vperm.xlu0 %86, %v17
  %v88 = vpop.permute.xlu0 %87
  %90 = vset.pattern.permute.xlu0 0
  %91 = vperm.xlu0 %90, %v18
  %v92 = vpop.permute.xlu0 %91
  %v94 = vsel %vm21, %v25, %v64
  %v95 = vsel %vm21, %v30, %v68
  %v96 = vsel %vm21, %v35, %v72
  %v97 = vsel %vm21, %v40, %v76
  %v98 = vsel %vm21, %v45, %v80
  %v99 = vsel %vm21, %v50, %v84
  %v100 = vsel %vm21, %v55, %v88
  %v101 = vsel %vm21, %v60, %v92
  %v102 = vld [vmem:[%s1] sm:$0x1]
  %v104 = vperm.slane %v102, 0
  %v106 = vsub.f32 %v94, %v104
  %v107 = vsub.f32 %v95, %v104
  %v108 = vsub.f32 %v96, %v104
  %v109 = vsub.f32 %v97, %v104
  %v110 = vsub.f32 %v98, %v104
  %v111 = vsub.f32 %v99, %v104
  %v112 = vsub.f32 %v100, %v104
  %v113 = vsub.f32 %v101, %v104
  %v114 = vmul.f32 %v106, %v106
  %v115 = vmul.f32 %v107, %v107
  %v116 = vmul.f32 %v108, %v108
  %v117 = vmul.f32 %v109, %v109
  %v118 = vmul.f32 %v110, %v110
  %v119 = vmul.f32 %v111, %v111
  %v120 = vmul.f32 %v112, %v112
  %v121 = vmul.f32 %v113, %v113
  %v122 = vsub.f32 0.0, %v114
  %v123 = vsub.f32 0.0, %v115
  %v124 = vsub.f32 0.0, %v116
  %v125 = vsub.f32 0.0, %v117
  %v126 = vsub.f32 0.0, %v118
  %v127 = vsub.f32 0.0, %v119
  %v128 = vsub.f32 0.0, %v120
  %v129 = vsub.f32 0.0, %v121
  %v130 = vmul.f32 %v122, 158.75978
  %v131 = vmul.f32 %v123, 158.75978
  %v132 = vmul.f32 %v124, 158.75978
  %v133 = vmul.f32 %v125, 158.75978
  %v134 = vmul.f32 %v126, 158.75978
  %v135 = vmul.f32 %v127, 158.75978
  %v136 = vmul.f32 %v128, 158.75978
  %v137 = vmul.f32 %v129, 158.75978
  %v138 = vmul.f32 %v130, 1.442695
  %v139 = vpow.pop %v138
  %v140 = vmul.f32 %v131, 1.442695
  %v141 = vpow.pop %v140
  %v142 = vmul.f32 %v132, 1.442695
  %v143 = vpow.pop %v142
  %v144 = vmul.f32 %v133, 1.442695
  %v145 = vpow.pop %v144
  %v146 = vmul.f32 %v134, 1.442695
  %v147 = vpow.pop %v146
  %v148 = vmul.f32 %v135, 1.442695
  %v149 = vpow.pop %v148
  %v150 = vmul.f32 %v136, 1.442695
  %v151 = vpow.pop %v150
  %v152 = vmul.f32 %v137, 1.442695
  %v153 = vpow.pop %v152
  %154 = vst [vmem:[%s2] sm:$0xff] %v139
  %155 = vst [vmem:[%s2 + $0x8] sm:$0xff] %v141
  %156 = vst [vmem:[%s2 + $0x10] sm:$0xff] %v143
  %157 = vst [vmem:[%s2 + $0x18] sm:$0xff] %v145
  %158 = vst [vmem:[%s2 + $0x20] sm:$0xff] %v147
  %159 = vst [vmem:[%s2 + $0x28] sm:$0xff] %v149
  %160 = vst [vmem:[%s2 + $0x30] sm:$0xff] %v151
  %161 = vst [vmem:[%s2 + $0x38] sm:$0xff] %v153
  // Predicated region
  $region10: #{_rbf_embed.1} parent=0 // pred_check
    _
  $region11: #{_rbf_embed.1} parent=0 // pred_check_branch
    %163 = sbr.rel (0) target = $region13
  $region12: #{_rbf_embed.1} parent=0 // pred_region
    _
  $region13: #{_rbf_embed.1} parent=0 // pred_fallthru
    _
  // Predicated region
  $region14: #{_rbf_embed.1} parent=0 // pred_check
    _
  $region15: #{_rbf_embed.1} parent=0 // pred_check_branch
    %165 = sbr.rel (0) target = $region17
  $region16: #{_rbf_embed.1} parent=0 // pred_region
    _
  $region17: #{_rbf_embed.1} parent=0 // pred_fallthru
    _

</llo_original>
